<compile_context>
chip_gen: v7x
topology: tpu7x:2x2x1
jax: 0.10.0
libtpu: 0.0.40
codegen_flags: <defaults>
</compile_context>

<pallas_src>
import functools

import jax
import jax.numpy as jnp
from jax.experimental import pallas as pl
from jax.experimental.pallas import tpu as pltpu

_LANES = 128
_SUBLANES = 8
_DEFAULT_TILE_B = 128          # <=128 so B>128 gives grid>=2 (v7x 2-TC split)
_INV_SQRT2 = 0.7071067811865476


def _round_up(x, m):
    return ((x + m - 1) // m) * m


def _cdiv(a, b):
    return -(-a // b)


# ---------------------------------------------------------------------------
# Kernel
# ---------------------------------------------------------------------------
def _classifier_kernel(x_ref, w1_ref, b1_ref, w2_ref, b2_ref, o_ref, *,
                       approximate_gelu=False):
    # x tile: (TILE_B, H_pad). Weights are (in, out), possibly bf16 (MXU only).
    x = x_ref[...].astype(jnp.float32)

    # linear1 on the MXU: bf16 (or f32) operands, f32 accumulation.
    h = jnp.dot(x.astype(w1_ref.dtype), w1_ref[...],
                preferred_element_type=jnp.float32)
    h = h + b1_ref[...]                                   # f32 bias broadcast

    if approximate_gelu:
        # tanh approximation -> EUP slot (cheap), slight deviation from torch.nn.GELU().
        h = jax.nn.gelu(h, approximate=True)
    else:
        # Exact (erf-based) GELU, matching torch.nn.GELU() default — all f32.
        h = 0.5 * h * (1.0 + jax.lax.erf(h * _INV_SQRT2))

    # Residual add in f32 (dropout2 is identity in eval mode).
    h = h + x

    # Output projection: lane-padded (H_pad, L_pad) weight -> (TILE_B, L_pad) block.
    logits = jnp.dot(h.astype(w2_ref.dtype), w2_ref[...],
                     preferred_element_type=jnp.float32)
    o_ref[...] = (logits + b2_ref[...]).astype(o_ref.dtype)


# ---------------------------------------------------------------------------
# One-time parameter preparation (hoisted out of the per-call path)
# ---------------------------------------------------------------------------
def prepare_params(w1, b1, w2, b2, compute_dtype=jnp.bfloat16):
    """w1: (H, H) torch (out,in) layout, b1: (H,), w2: (L, H), b2: (L,).

    Returns kernel-ready params: transposed (in,out) weights in `compute_dtype`,
    f32 2-D biases, with both hidden and label dims zero-padded to 128 lanes.
    Zero padding is algebraically inert (padded rows/cols/biases are zero).
    """
    H = w1.shape[1]
    L = w2.shape[0]
    H_pad = _round_up(H, _LANES)
    L_pad = _round_up(max(L, 1), _LANES)

    w1_t = jnp.zeros((H_pad, H_pad), compute_dtype).at[:H, :H].set(
        jnp.transpose(w1).astype(compute_dtype))                      # (H_pad, H_pad)
    b1_2d = jnp.zeros((1, H_pad), jnp.float32).at[:, :H].set(
        b1.astype(jnp.float32))                                       # (1, H_pad)
    w2_t = jnp.zeros((H_pad, L_pad), compute_dtype).at[:H, :L].set(
        jnp.transpose(w2).astype(compute_dtype))                      # (H_pad, L_pad)
    b2_2d = jnp.zeros((1, L_pad), jnp.float32).at[:, :L].set(
        b2.astype(jnp.float32))                                       # (1, L_pad)

    return {"w1_t": w1_t, "b1": b1_2d, "w2_t": w2_t, "b2": b2_2d,
            "hidden": H, "num_labels": L}


def _pick_tile_b(B, requested):
    """Sublane-aligned batch tile; splits small batches so v7x's 2 TCs engage."""
    requested = max(_SUBLANES, _round_up(requested, _SUBLANES))
    if B > requested:
        return requested
    if B >= 2 * _SUBLANES:
        # Two tiles (last one possibly partial) -> grid >= 2 for the 2-TC split.
        return _round_up(_cdiv(B, 2), _SUBLANES)
    # Single tile whose sublane dim equals the full array dim (always legal).
    return B


# ---------------------------------------------------------------------------
# Forward wrapper
# ---------------------------------------------------------------------------
def custom_classifier_forward(cls_emb, params, tile_b=_DEFAULT_TILE_B,
                              approximate_gelu=False):
    """cls_emb: (B, H) float32. params: output of prepare_params."""
    w1_t, b1_2d = params["w1_t"], params["b1"]
    w2_t, b2_2d = params["w2_t"], params["b2"]
    H, L = params["hidden"], params["num_labels"]

    B = cls_emb.shape[0]
    H_pad = w1_t.shape[0]
    L_pad = w2_t.shape[1]

    x = cls_emb
    if H_pad != H:
        # Lane-pad the hidden dim once (only when H % 128 != 0).
        x = jnp.pad(cls_emb, ((0, 0), (0, H_pad - H)))

    tile_b = _pick_tile_b(B, tile_b)
    grid_b = _cdiv(B, tile_b)          # partial last block handled by Pallas masking

    # Explicit VMEM budget: single-buffered weights + double-buffered streams
    # + f32 temporaries, with ~25% headroom.
    w_bytes = int(w1_t.size) * w1_t.dtype.itemsize + int(w2_t.size) * w2_t.dtype.itemsize
    bias_bytes = (int(b1_2d.size) + int(b2_2d.size)) * 4
    x_bytes = 2 * tile_b * H_pad * x.dtype.itemsize
    o_bytes = 2 * tile_b * L_pad * cls_emb.dtype.itemsize
    tmp_bytes = 4 * tile_b * H_pad * 4
    vmem_limit = int(1.25 * (w_bytes + bias_bytes + x_bytes + o_bytes + tmp_bytes)) + (2 << 20)
    vmem_limit = min(max(vmem_limit, 4 << 20), 128 << 20)

    cost = pl.CostEstimate(
        flops=2 * B * H_pad * H_pad + 2 * B * H_pad * L_pad,
        transcendentals=B * H_pad,                         # erf/tanh in GELU
        bytes_accessed=B * H_pad * x.dtype.itemsize + w_bytes + bias_bytes
                       + B * L_pad * cls_emb.dtype.itemsize,
    )

    resident = lambda i: (0, 0)        # constant block index -> stays VMEM-resident
    out = pl.pallas_call(
        functools.partial(_classifier_kernel, approximate_gelu=approximate_gelu),
        out_shape=jax.ShapeDtypeStruct((B, L_pad), cls_emb.dtype),
        grid=(grid_b,),
        in_specs=[
            # Activations stream over B (default double-buffering).
            pl.BlockSpec((tile_b, H_pad), lambda i: (i, 0)),
            # Weights / biases: constant index map + single buffer (no pointless
            # double-buffering of multi-MiB resident operands).
            pl.BlockSpec((H_pad, H_pad), resident, pipeline_mode=pl.Buffered(1)),
            pl.BlockSpec((1, H_pad), resident, pipeline_mode=pl.Buffered(1)),
            pl.BlockSpec((H_pad, L_pad), resident, pipeline_mode=pl.Buffered(1)),
            pl.BlockSpec((1, L_pad), resident, pipeline_mode=pl.Buffered(1)),
        ],
        out_specs=pl.BlockSpec((tile_b, L_pad), lambda i: (i, 0)),
        compiler_params=pltpu.CompilerParams(
            dimension_semantics=("parallel",),             # 2x TC sharding on v7x
            vmem_limit_bytes=vmem_limit,
        ),
        cost_estimate=cost,
    )(x, w1_t, b1_2d, w2_t, b2_2d)

    # Strip label-lane padding (trivial XLA slice); batch dim is already exact.
    return out[:, :L]


# ---------------------------------------------------------------------------
# Pure-JAX reference (mirrors the PyTorch module in eval mode)
# ---------------------------------------------------------------------------
def reference_forward(cls_emb, w1, b1, w2, b2):
    h = cls_emb @ w1.T + b1
    h = jax.nn.gelu(h, approximate=False)
    h = h + cls_emb
    return h @ w2.T + b2


if __name__ == "__main__":
    hidden_size = 32
    num_labels = 2
    batch = 2

    key = jax.random.PRNGKey(0)
    k_x, k_w1, k_b1, k_w2, k_b2, k_x2 = jax.random.split(key, 6)

    # Deterministic synthetic parameters (shapes follow nn.Linear: (out, in)).
    cls_emb = jax.random.normal(k_x, (batch, hidden_size), dtype=jnp.float32)
    w1 = jax.random.normal(k_w1, (hidden_size, hidden_size), dtype=jnp.float32) * 0.1
    b1 = jax.random.normal(k_b1, (hidden_size,), dtype=jnp.float32) * 0.1
    w2 = jax.random.normal(k_w2, (num_labels, hidden_size), dtype=jnp.float32) * 0.1
    b2 = jax.random.normal(k_b2, (num_labels,), dtype=jnp.float32) * 0.1

    ref = reference_forward(cls_emb, w1, b1, w2, b2)

    # Default path: bf16 MXU operands, f32 accumulation + f32 elementwise.
    params_bf16 = prepare_params(w1, b1, w2, b2, compute_dtype=jnp.bfloat16)
    logits = custom_classifier_forward(cls_emb, params_bf16)
    jax.block_until_ready(logits)
    assert logits.shape == (batch, num_labels)
    assert jnp.allclose(logits, ref, atol=3e-2, rtol=3e-2), (
        f"bf16-path mismatch: max err {jnp.max(jnp.abs(logits - ref))}"
    )

    # f32 path: verifies the fused math tightly against the reference.
    params_f32 = prepare_params(w1, b1, w2, b2, compute_dtype=jnp.float32)
    logits_f32 = custom_classifier_forward(cls_emb, params_f32)
    jax.block_until_ready(logits_f32)
    assert jnp.allclose(logits_f32, ref, atol=1e-4, rtol=1e-4), (
        f"f32-path mismatch: max err {jnp.max(jnp.abs(logits_f32 - ref))}"
    )

    # Multi-tile path: exercises cdiv grid + masked partial last block (B=20 ->
    # tile_b=16, grid=2, second block has 4 valid rows) without any HBM padding.
    batch2 = 20
    cls_emb2 = jax.random.normal(k_x2, (batch2, hidden_size), dtype=jnp.float32)
    ref2 = reference_forward(cls_emb2, w1, b1, w2, b2)
    logits2 = custom_classifier_forward(cls_emb2, params_f32)
    jax.block_until_ready(logits2)
    assert logits2.shape == (batch2, num_labels)
    assert jnp.allclose(logits2, ref2, atol=1e-4, rtol=1e-4), (
        f"multi-tile mismatch: max err {jnp.max(jnp.abs(logits2 - ref2))}"
    )

    print("KERNEL_OK")
</pallas_src>

<mosaic_0001>
module attributes {stable_mosaic.version = 11 : i64} {
  func.func @_classifier_kernel(%arg0: i32, %arg1: memref<2x128xf32, #tpu.memory_space<vmem>>, %arg2: memref<128x128xbf16, #tpu.memory_space<vmem>>, %arg3: memref<1x128xf32, #tpu.memory_space<vmem>>, %arg4: memref<128x128xbf16, #tpu.memory_space<vmem>>, %arg5: memref<1x128xf32, #tpu.memory_space<vmem>>, %arg6: memref<2x128xf32, #tpu.memory_space<vmem>>) attributes {dimension_semantics = [#tpu.dimension_semantics<parallel>], iteration_bounds = array<i64: 1>, scalar_prefetch = 0 : i64, scratch_operands = 0 : i64, tpu.core_type = #tpu.core_type<tc>, window_params = [{transform_indices = @transform_0, window_bounds = array<i64: 2, 128>}, {pipeline_mode = #tpu.pipeline_mode<synchronous>, transform_indices = @transform_1, window_bounds = array<i64: 128, 128>}, {pipeline_mode = #tpu.pipeline_mode<synchronous>, transform_indices = @transform_2, window_bounds = array<i64: 1, 128>}, {pipeline_mode = #tpu.pipeline_mode<synchronous>, transform_indices = @transform_3, window_bounds = array<i64: 128, 128>}, {pipeline_mode = #tpu.pipeline_mode<synchronous>, transform_indices = @transform_4, window_bounds = array<i64: 1, 128>}, {transform_indices = @transform_5, window_bounds = array<i64: 2, 128>}]} {
    %c0 = arith.constant 0 : index
    %c0_0 = arith.constant 0 : index
    %0 = vector.load %arg1[%c0, %c0_0] : memref<2x128xf32, #tpu.memory_space<vmem>>, vector<2x128xf32>
    %1 = arith.truncf %0 : vector<2x128xf32> to vector<2x128xbf16>
    %c0_1 = arith.constant 0 : index
    %c0_2 = arith.constant 0 : index
    %2 = vector.load %arg2[%c0_1, %c0_2] : memref<128x128xbf16, #tpu.memory_space<vmem>>, vector<128x128xbf16>
    %cst = arith.constant dense<0.000000e+00> : vector<2x128xf32>
    %3 = tpu.matmul %1, %2, %cst {dimension_numbers = #tpu.dot_dimension_numbers<[1], [0], [0], [1], [0, 0, 1, 1], [], []>} : vector<2x128xbf16>, vector<128x128xbf16>, vector<2x128xf32> -> vector<2x128xf32>
    %c0_3 = arith.constant 0 : index
    %c0_4 = arith.constant 0 : index
    %4 = vector.load %arg3[%c0_3, %c0_4] : memref<1x128xf32, #tpu.memory_space<vmem>>, vector<1x128xf32>
    %5 = vector.broadcast %4 : vector<1x128xf32> to vector<2x128xf32>
    %6 = arith.addf %3, %5 : vector<2x128xf32>
    %cst_5 = arith.constant 5.000000e-01 : f32
    %7 = vector.broadcast %cst_5 : f32 to vector<2x128xf32>
    %8 = arith.mulf %7, %6 : vector<2x128xf32>
    %cst_6 = arith.constant 0.707106769 : f32
    %9 = vector.broadcast %cst_6 : f32 to vector<2x128xf32>
    %10 = arith.mulf %6, %9 : vector<2x128xf32>
    %11 = math.erf %10 : vector<2x128xf32>
    %cst_7 = arith.constant 1.000000e+00 : f32
    %12 = vector.broadcast %cst_7 : f32 to vector<2x128xf32>
    %13 = arith.addf %12, %11 : vector<2x128xf32>
    %14 = arith.mulf %8, %13 : vector<2x128xf32>
    %15 = arith.addf %14, %0 : vector<2x128xf32>
    %16 = arith.truncf %15 : vector<2x128xf32> to vector<2x128xbf16>
    %c0_8 = arith.constant 0 : index
    %c0_9 = arith.constant 0 : index
    %17 = vector.load %arg4[%c0_8, %c0_9] : memref<128x128xbf16, #tpu.memory_space<vmem>>, vector<128x128xbf16>
    %cst_10 = arith.constant dense<0.000000e+00> : vector<2x128xf32>
    %18 = tpu.matmul %16, %17, %cst_10 {dimension_numbers = #tpu.dot_dimension_numbers<[1], [0], [0], [1], [0, 0, 1, 1], [], []>} : vector<2x128xbf16>, vector<128x128xbf16>, vector<2x128xf32> -> vector<2x128xf32>
    %c0_11 = arith.constant 0 : index
    %c0_12 = arith.constant 0 : index
    %19 = vector.load %arg5[%c0_11, %c0_12] : memref<1x128xf32, #tpu.memory_space<vmem>>, vector<1x128xf32>
    %20 = vector.broadcast %19 : vector<1x128xf32> to vector<2x128xf32>
    %21 = arith.addf %18, %20 : vector<2x128xf32>
    %c0_13 = arith.constant 0 : index
    %c0_14 = arith.constant 0 : index
    %22 = vector.load %arg6[%c0_13, %c0_14] : memref<2x128xf32, #tpu.memory_space<vmem>>, vector<2x128xf32>
    tpu.vector_store %arg6[%c0_13, %c0_14], %21 {strides = array<i32>} : memref<2x128xf32, #tpu.memory_space<vmem>>, vector<2x128xf32>,
    return
  }
  func.func @transform_0(%arg0: i32) -> (i32, i32) {
    %c0_i32 = arith.constant 0 : i32
    %c0_i32_0 = arith.constant 0 : i32
    return %arg0, %c0_i32 : i32, i32
  }
  func.func @transform_1(%arg0: i32) -> (i32, i32) {
    %c0_i32 = arith.constant 0 : i32
    %c0_i32_0 = arith.constant 0 : i32
    %c0_i32_1 = arith.constant 0 : i32
    return %c0_i32, %c0_i32_0 : i32, i32
  }
  func.func @transform_2(%arg0: i32) -> (i32, i32) {
    %c0_i32 = arith.constant 0 : i32
    %c0_i32_0 = arith.constant 0 : i32
    %c0_i32_1 = arith.constant 0 : i32
    return %c0_i32, %c0_i32_0 : i32, i32
  }
  func.func @transform_3(%arg0: i32) -> (i32, i32) {
    %c0_i32 = arith.constant 0 : i32
    %c0_i32_0 = arith.constant 0 : i32
    %c0_i32_1 = arith.constant 0 : i32
    return %c0_i32, %c0_i32_0 : i32, i32
  }
  func.func @transform_4(%arg0: i32) -> (i32, i32) {
    %c0_i32 = arith.constant 0 : i32
    %c0_i32_0 = arith.constant 0 : i32
    %c0_i32_1 = arith.constant 0 : i32
    return %c0_i32, %c0_i32_0 : i32, i32
  }
  func.func @transform_5(%arg0: i32) -> (i32, i32) {
    %c0_i32 = arith.constant 0 : i32
    %c0_i32_0 = arith.constant 0 : i32
    return %arg0, %c0_i32 : i32, i32
  }
}

</mosaic_0001>

<llo_original>
// kernel: tpu_custom_call.1
$region0: #{tpu_custom_call.1}
  #allocation0 [shape = 'u32[]', space=smem, size = 0x4, offset = 0x4, fixed_abs, tag = 'smem constant byte address 0x4 - core index']
  #allocation1 [shape = 'u32[144,128]{1,0:T(1,128)}', space=vmem, size = 0x12000, scoped, tag = 'internal scratch']
  %s0 = inlined_call_operand.hbm [shape: f32[2,128], index: 0, kind: input, shape index: {}]
  %s1 = inlined_call_operand.hbm [shape: bf16[128,128], index: 1, kind: input, shape index: {}]
  %s2 = inlined_call_operand.vmem [shape: f32[1,128], index: 2, kind: input, shape index: {}]
  %s3 = inlined_call_operand.hbm [shape: bf16[128,128], index: 3, kind: input, shape index: {}]
  %s4 = inlined_call_operand.vmem [shape: f32[1,128], index: 4, kind: input, shape index: {}]
  %s5 = inlined_call_operand.hbm [shape: f32[2,128], index: 5, kind: output, shape index: {}]
  %s6 = sld [smem:[#allocation0]]
  $region42: #{tpu_custom_call.1} parent=0
    _
  %s8 = ssub.s32 1, %s6
  %s9 = scalar_select 0, %s8, %s6
  $region1: #{tpu_custom_call.1} parent=0
    #allocation2 [shape = 'u8[1024]{0}', space=vmem, size = 0x400, scoped, tag = 'input window, operand 0, single buffered']
    #allocation3 [shape = 's32[1]{0}', space=sflag, size = 0x4, scoped, tag = 'scoped memory for tpu_custom_call.1']
    #allocation4 [shape = 's32[1]{0}', space=sflag, size = 0x4, scoped, tag = 'scoped memory for tpu_custom_call.1']
    #allocation5 [shape = 'u8[32768]{0}', space=vmem, size = 0x8000, scoped, tag = 'input window, operand 1, single buffered']
    #allocation6 [shape = 's32[1]{0}', space=sflag, size = 0x4, scoped, tag = 'scoped memory for tpu_custom_call.1']
    #allocation7 [shape = 'u8[32768]{0}', space=vmem, size = 0x8000, scoped, tag = 'input window, operand 3, single buffered']
    #allocation8 [shape = 'u8[1024]{0}', space=vmem, size = 0x400, scoped, tag = 'output window, operand 0, single buffered']
    %10 = vsyncpa [#allocation3], 0
    %11 = vsyncpa [#allocation6], 0
    %12 = vsyncpa [#allocation4], 0
    // Predicated region
    $region2: #{tpu_custom_call.1} parent=1 // pred_check
      _
    $region3: #{tpu_custom_call.1} parent=1 // pred_check_branch
      %14 = sbr.rel (0) target = $region5
    $region4: #{tpu_custom_call.1} parent=1 // pred_region
      %s16 = ssub.s32 32, 32
      %17 = vsyncadd [#allocation3], %s16
      %s19 = sshll.u32 [#allocation2], 4
      %s20 = int_to_ptr.vmem [resolvable:$true] %s19
      %22 = dma.hbm_to_vmem [thread:$0]  %s0, 32, %s20, [#allocation3]
    $region5: #{tpu_custom_call.1} parent=1 // pred_fallthru
      _
    // Predicated region
    $region6: #{tpu_custom_call.1} parent=1 // pred_check
      _
    $region7: #{tpu_custom_call.1} parent=1 // pred_check_branch
      %24 = sbr.rel (0) target = $region9
    $region8: #{tpu_custom_call.1} parent=1 // pred_region
      %s26 = ssub.s32 1024, 1024
      %27 = vsyncadd [#allocation6], %s26
      %s28 = sshll.u32 [#allocation5], 4
      %s29 = int_to_ptr.vmem [resolvable:$true] %s28
      %34 = dma.hbm_to_vmem [thread:$0]  %s1, 1024, %s29, [#allocation6], 64, 64, 4
    $region9: #{tpu_custom_call.1} parent=1 // pred_fallthru
      _
    // Predicated region
    $region10: #{tpu_custom_call.1} parent=1 // pred_check
      _
    $region11: #{tpu_custom_call.1} parent=1 // pred_check_branch
      %36 = sbr.rel (0) target = $region13
    $region12: #{tpu_custom_call.1} parent=1 // pred_region
      _
    $region13: #{tpu_custom_call.1} parent=1 // pred_fallthru
      _
    // Predicated region
    $region14: #{tpu_custom_call.1} parent=1 // pred_check
      _
    $region15: #{tpu_custom_call.1} parent=1 // pred_check_branch
      %38 = sbr.rel (0) target = $region17
    $region16: #{tpu_custom_call.1} parent=1 // pred_region
      %s40 = ssub.s32 1024, 1024
      %41 = vsyncadd [#allocation6], %s40
      %s42 = sshll.u32 [#allocation7], 4
      %s43 = int_to_ptr.vmem [resolvable:$true] %s42
      %48 = dma.hbm_to_vmem [thread:$0]  %s3, 1024, %s43, [#allocation6], 64, 64, 4
    $region17: #{tpu_custom_call.1} parent=1 // pred_fallthru
      _
    // Predicated region
    $region18: #{tpu_custom_call.1} parent=1 // pred_check
      _
    $region19: #{tpu_custom_call.1} parent=1 // pred_check_branch
      %50 = sbr.rel (0) target = $region21
    $region20: #{tpu_custom_call.1} parent=1 // pred_region
      _
    $region21: #{tpu_custom_call.1} parent=1 // pred_fallthru
      _
    // Predicated region
    $region22: #{tpu_custom_call.1} parent=1 // pred_check
      _
    $region23: #{tpu_custom_call.1} parent=1 // pred_check_branch
      %52 = sbr.rel (0) target = $region25
    $region24: #{tpu_custom_call.1} parent=1 // pred_region
      %53 = dma.done [#allocation3], 32
    $region25: #{tpu_custom_call.1} parent=1 // pred_fallthru
      _
    // Predicated region
    $region26: #{tpu_custom_call.1} parent=1 // pred_check
      _
    $region27: #{tpu_custom_call.1} parent=1 // pred_check_branch
      %55 = sbr.rel (0) target = $region29
    $region28: #{tpu_custom_call.1} parent=1 // pred_region
      %56 = dma.done [#allocation6], 1024
    $region29: #{tpu_custom_call.1} parent=1 // pred_fallthru
      _
    // Predicated region
    $region30: #{tpu_custom_call.1} parent=1 // pred_check
      _
    $region31: #{tpu_custom_call.1} parent=1 // pred_check_branch
      %58 = sbr.rel (0) target = $region33
    $region32: #{tpu_custom_call.1} parent=1 // pred_region
      %59 = dma.done [#allocation6], 1024
    $region33: #{tpu_custom_call.1} parent=1 // pred_fallthru
      _
    %v61 = vld [vmem:[#allocation2] sm:$0x3]
    %v62 = vpack.c.bf16 %v61, %v61
    %v63 = vld [vmem:[#allocation5] sm:$0xf]
    %v64 = vld [vmem:[#allocation5 + $0x4] sm:$0xf]
    %v65 = vld [vmem:[#allocation5 + $0x8] sm:$0xf]
    %v66 = vld [vmem:[#allocation5 + $0xc] sm:$0xf]
    %v67 = vld [vmem:[#allocation5 + $0x10] sm:$0xf]
    %v68 = vld [vmem:[#allocation5 + $0x14] sm:$0xf]
    %v69 = vld [vmem:[#allocation5 + $0x18] sm:$0xf]
    %v70 = vld [vmem:[#allocation5 + $0x1c] sm:$0xf]
    %v71 = vld [vmem:[#allocation5 + $0x20] sm:$0xf]
    %v72 = vld [vmem:[#allocation5 + $0x24] sm:$0xf]
    %v73 = vld [vmem:[#allocation5 + $0x28] sm:$0xf]
    %v74 = vld [vmem:[#allocation5 + $0x2c] sm:$0xf]
    %v75 = vld [vmem:[#allocation5 + $0x30] sm:$0xf]
    %v76 = vld [vmem:[#allocation5 + $0x34] sm:$0xf]
    %v77 = vld [vmem:[#allocation5 + $0x38] sm:$0xf]
    %v78 = vld [vmem:[#allocation5 + $0x3c] sm:$0xf]
    %v79 = vld [vmem:[%s2] sm:$0x1]
    %v81 = vlaneseq
    %v82 = vshrl.u32 %v81, 7
    %v83 = vsub.s32 0, %v82
    %v84 = vrot.slane %v79, %v83
    %v102 = vunpack.c.l.b16 %v63
    %v103 = vunpack.c.l.b16 %v64
    %v104 = vunpack.c.l.b16 %v65
    %v105 = vunpack.c.l.b16 %v66
    %v106 = vunpack.c.l.b16 %v67
    %v107 = vunpack.c.l.b16 %v68
    %v108 = vunpack.c.l.b16 %v69
    %v109 = vunpack.c.l.b16 %v70
    %v110 = vunpack.c.l.b16 %v71
    %v111 = vunpack.c.l.b16 %v72
    %v112 = vunpack.c.l.b16 %v73
    %v113 = vunpack.c.l.b16 %v74
    %v114 = vunpack.c.l.b16 %v75
    %v115 = vunpack.c.l.b16 %v76
    %v116 = vunpack.c.l.b16 %v77
    %v117 = vunpack.c.l.b16 %v78
    %v118 = vpack.c.b16 %v103, %v102
    %v119 = vpack.c.b16 %v105, %v104
    %v120 = vpack.c.b16 %v107, %v106
    %v121 = vpack.c.b16 %v109, %v108
    %v122 = vpack.c.b16 %v111, %v110
    %v123 = vpack.c.b16 %v113, %v112
    %v124 = vpack.c.b16 %v115, %v114
    %v125 = vpack.c.b16 %v117, %v116
    %134 = vmatprep.subr.bf16.mxu0 0
    %135 = vmatpush1.bf16.msra.mxu0 %v118
    %136 = vmatprep.subr.bf16.mxu0 0
    %137 = vmatpush1.bf16.msra.mxu0 %v119
    %138 = vmatprep.subr.bf16.mxu0 0
    %139 = vmatpush1.bf16.msra.mxu0 %v120
    %140 = vmatprep.subr.bf16.mxu0 0
    %141 = vmatpush1.bf16.msra.mxu0 %v121
    %142 = vmatprep.subr.bf16.mxu0 0
    %143 = vmatpush1.bf16.msra.mxu0 %v122
    %144 = vmatprep.subr.bf16.mxu0 0
    %145 = vmatpush1.bf16.msra.mxu0 %v123
    %146 = vmatprep.subr.bf16.mxu0 0
    %147 = vmatpush1.bf16.msra.mxu0 %v124
    %148 = vmatprep.subr.bf16.mxu0 0
    %149 = vmatpush1.bf16.msra.mxu0 %v125
    %150 = vmatprep.subr.bf16.mxu0 0
    %151 = vmatpush1.bf16.msra.mxu0 0
    %152 = vmatprep.subr.bf16.mxu0 0
    %153 = vmatpush1.bf16.msra.mxu0 0
    %154 = vmatprep.subr.bf16.mxu0 0
    %155 = vmatpush1.bf16.msra.mxu0 0
    %156 = vmatprep.subr.bf16.mxu0 0
    %157 = vmatpush1.bf16.msra.mxu0 0
    %158 = vmatprep.subr.bf16.mxu0 0
    %159 = vmatpush1.bf16.msra.mxu0 0
    %160 = vmatprep.subr.bf16.mxu0 0
    %161 = vmatpush1.bf16.msra.mxu0 0
    %162 = vmatprep.subr.bf16.mxu0 0
    %163 = vmatpush1.bf16.msra.mxu0 0
    %164 = vmatprep.subr.bf16.mxu0 0
    %165 = vmatpush1.bf16.msra.mxu0 0
    %166 = vmatprep.mubr.bf16.mxu0 0
    %167 = vmatmul.mubr.bf16.gmra.mrb[0].mxu0 %v62
    %v168 = vpop.f32.mrb[0].mxu0
    %v169 = vadd.f32 %v84, %v168
    %v170 = vpop.f32.mrb[0].mxu0
    %v171 = vpop.f32.mrb[0].mxu0
    %v172 = vpop.f32.mrb[0].mxu0
    %173 = vdwg.mxu0
    %v174 = vmul.f32 %v169, 0.5
    %v175 = vmul.f32 %v169, 0.70710677
    %v176 = verf.f32.pop %v175
    %v177 = vadd.f32 %v176, 1.0
    %v178 = vmul.f32 %v174, %v177
    %v179 = vadd.f32 %v178, %v61
    %v180 = vpack.c.bf16 %v179, %v179
    %v181 = vld [vmem:[#allocation7] sm:$0xf]
    %v182 = vld [vmem:[#allocation7 + $0x4] sm:$0xf]
    %v183 = vld [vmem:[#allocation7 + $0x8] sm:$0xf]
    %v184 = vld [vmem:[#allocation7 + $0xc] sm:$0xf]
    %v185 = vld [vmem:[#allocation7 + $0x10] sm:$0xf]
    %v186 = vld [vmem:[#allocation7 + $0x14] sm:$0xf]
    %v187 = vld [vmem:[#allocation7 + $0x18] sm:$0xf]
    %v188 = vld [vmem:[#allocation7 + $0x1c] sm:$0xf]
    %v189 = vld [vmem:[#allocation7 + $0x20] sm:$0xf]
    %v190 = vld [vmem:[#allocation7 + $0x24] sm:$0xf]
    %v191 = vld [vmem:[#allocation7 + $0x28] sm:$0xf]
    %v192 = vld [vmem:[#allocation7 + $0x2c] sm:$0xf]
    %v193 = vld [vmem:[#allocation7 + $0x30] sm:$0xf]
    %v194 = vld [vmem:[#allocation7 + $0x34] sm:$0xf]
    %v195 = vld [vmem:[#allocation7 + $0x38] sm:$0xf]
    %v196 = vld [vmem:[#allocation7 + $0x3c] sm:$0xf]
    %v197 = vld [vmem:[%s4] sm:$0x1]
    %v199 = vlaneseq
    %v200 = vshrl.u32 %v199, 7
    %v201 = vsub.s32 0, %v200
    %v202 = vrot.slane %v197, %v201
    %v220 = vunpack.c.l.b16 %v181
    %v221 = vunpack.c.l.b16 %v182
    %v222 = vunpack.c.l.b16 %v183
    %v223 = vunpack.c.l.b16 %v184
    %v224 = vunpack.c.l.b16 %v185
    %v225 = vunpack.c.l.b16 %v186
    %v226 = vunpack.c.l.b16 %v187
    %v227 = vunpack.c.l.b16 %v188
    %v228 = vunpack.c.l.b16 %v189
    %v229 = vunpack.c.l.b16 %v190
    %v230 = vunpack.c.l.b16 %v191
    %v231 = vunpack.c.l.b16 %v192
    %v232 = vunpack.c.l.b16 %v193
    %v233 = vunpack.c.l.b16 %v194
    %v234 = vunpack.c.l.b16 %v195
    %v235 = vunpack.c.l.b16 %v196
    %v236 = vpack.c.b16 %v221, %v220
    %v237 = vpack.c.b16 %v223, %v222
    %v238 = vpack.c.b16 %v225, %v224
    %v239 = vpack.c.b16 %v227, %v226
    %v240 = vpack.c.b16 %v229, %v228
    %v241 = vpack.c.b16 %v231, %v230
    %v242 = vpack.c.b16 %v233, %v232
    %v243 = vpack.c.b16 %v235, %v234
    %252 = vmatprep.subr.bf16.mxu0 0
    %253 = vmatpush1.bf16.msra.mxu0 %v236
    %254 = vmatprep.subr.bf16.mxu0 0
    %255 = vmatpush1.bf16.msra.mxu0 %v237
    %256 = vmatprep.subr.bf16.mxu0 0
    %257 = vmatpush1.bf16.msra.mxu0 %v238
    %258 = vmatprep.subr.bf16.mxu0 0
    %259 = vmatpush1.bf16.msra.mxu0 %v239
    %260 = vmatprep.subr.bf16.mxu0 0
    %261 = vmatpush1.bf16.msra.mxu0 %v240
    %262 = vmatprep.subr.bf16.mxu0 0
    %263 = vmatpush1.bf16.msra.mxu0 %v241
    %264 = vmatprep.subr.bf16.mxu0 0
    %265 = vmatpush1.bf16.msra.mxu0 %v242
    %266 = vmatprep.subr.bf16.mxu0 0
    %267 = vmatpush1.bf16.msra.mxu0 %v243
    %268 = vmatprep.subr.bf16.mxu0 0
    %269 = vmatpush1.bf16.msra.mxu0 0
    %270 = vmatprep.subr.bf16.mxu0 0
    %271 = vmatpush1.bf16.msra.mxu0 0
    %272 = vmatprep.subr.bf16.mxu0 0
    %273 = vmatpush1.bf16.msra.mxu0 0
    %274 = vmatprep.subr.bf16.mxu0 0
    %275 = vmatpush1.bf16.msra.mxu0 0
    %276 = vmatprep.subr.bf16.mxu0 0
    %277 = vmatpush1.bf16.msra.mxu0 0
    %278 = vmatprep.subr.bf16.mxu0 0
    %279 = vmatpush1.bf16.msra.mxu0 0
    %280 = vmatprep.subr.bf16.mxu0 0
    %281 = vmatpush1.bf16.msra.mxu0 0
    %282 = vmatprep.subr.bf16.mxu0 0
    %283 = vmatpush1.bf16.msra.mxu0 0
    %284 = vmatprep.mubr.bf16.mxu0 0
    %285 = vmatmul.mubr.bf16.gmra.mrb[0].mxu0 %v180
    %v286 = vpop.f32.mrb[0].mxu0
    %v287 = vadd.f32 %v202, %v286
    %v288 = vpop.f32.mrb[0].mxu0
    %v289 = vpop.f32.mrb[0].mxu0
    %v290 = vpop.f32.mrb[0].mxu0
    %291 = vdwg.mxu0
    %292 = vst [vmem:[#allocation8] sm:$0x3] %v287
    // Predicated region
    $region34: #{tpu_custom_call.1} parent=1 // pred_check
      _
    $region35: #{tpu_custom_call.1} parent=1 // pred_check_branch
      %294 = sbr.rel (0) target = $region37
    $region36: #{tpu_custom_call.1} parent=1 // pred_region
      %s296 = ssub.s32 32, 32
      %297 = vsyncadd [#allocation4], %s296
      %s299 = sshll.u32 [#allocation8], 4
      %s300 = int_to_ptr.vmem [resolvable:$true] %s299
      %302 = dma.vmem_to_hbm [thread:$0]  %s300, 32, %s5, [#allocation4]
    $region37: #{tpu_custom_call.1} parent=1 // pred_fallthru
      _
    // Predicated region
    $region38: #{tpu_custom_call.1} parent=1 // pred_check
      _
    $region39: #{tpu_custom_call.1} parent=1 // pred_check_branch
      %304 = sbr.rel (0) target = $region41
    $region40: #{tpu_custom_call.1} parent=1 // pred_region
      %305 = dma.done [#allocation4], 32
    $region41: #{tpu_custom_call.1} parent=1 // pred_fallthru
      _
    %306 = vsyncpa [#allocation3], 1
    %307 = vsyncpa [#allocation6], 1
    %308 = vsyncpa [#allocation4], 1

</llo_original>
